<compile_context>
chip_gen: v7x
topology: tpu7x:2x2x1
jax: 0.10.0
libtpu: 0.0.40
codegen_flags: <defaults>
</compile_context>

<pallas_src>
import functools

import jax
import jax.numpy as jnp
from jax.experimental import pallas as pl
from jax.experimental.pallas import tpu as pltpu


def _round_up(x, m):
    return (x + m - 1) // m * m


def _vmem_capacity_bytes():
    try:
        return int(pltpu.get_tpu_info().vmem_capacity_bytes)
    except Exception:
        return 64 * 1024 * 1024  # conservative fallback (v7x per-core VMEM)


def _fused_footprint_bytes(E_pad, H_pad, tile_v, B_pad):
    """Conservative (2x-buffered) VMEM footprint of the fused kernel."""
    resident = 2 * (E_pad * 3 * H_pad * 2        # w_ih bf16
                    + H_pad * 3 * H_pad * 2      # w_hh bf16
                    + 2 * 3 * H_pad * 4          # biases f32
                    + B_pad * H_pad * 4)         # h0 f32
    pipelined = 2 * (H_pad * tile_v * 2          # w_out bf16 tile (double buffered)
                     + tile_v * 4                # b_out f32 tile
                     + B_pad * tile_v * 4)       # logits f32 tile
    out_h = 2 * B_pad * H_pad * 4                # h_new output
    scratch = B_pad * E_pad * 4 + B_pad * H_pad * 2
    return resident + pipelined + out_h + scratch


_TILE_CANDIDATES = (8192, 4096, 2048, 1024, 512, 256, 128)


def _pick_tile_v(V, E_pad, H_pad, max_vocab_tile, b_pad_hint):
    budget = int(0.72 * _vmem_capacity_bytes())
    v_cap = _round_up(V, 128)
    for cand in _TILE_CANDIDATES:
        if cand > max_vocab_tile or cand > v_cap:
            continue
        if _fused_footprint_bytes(E_pad, H_pad, cand, b_pad_hint) <= budget:
            return cand
    return 128


# --------------------------------------------------------------------------
# Fused kernel: embedding gather + GRU step (grid step 0) + vocab projection.
# --------------------------------------------------------------------------
def _fused_decoder_kernel(batch, tok_ref, emb_hbm, wih_ref, whh_ref, bih_ref,
                          bhh_ref, h0_ref, wout_ref, bout_ref,
                          logits_ref, hnew_ref,
                          x_scratch, hbf_scratch, gather_sem):
    # tok_ref : (B_pad,) int32 SMEM (scalar prefetch)
    # emb_hbm : (V, E_pad) f32 HBM           wih_ref : (E_pad, 3*H_pad) bf16
    # whh_ref : (H_pad, 3*H_pad) bf16        bih/bhh : (1, 3*H_pad) f32
    # h0_ref  : (B_pad, H_pad) f32           wout_ref: (H_pad, tile_v) bf16
    # bout_ref: (1, tile_v) f32              logits_ref: (B_pad, tile_v) f32
    # hnew_ref: (B_pad, H_pad) f32 (constant block index -> written once)
    # x_scratch: (B_pad, E_pad) f32 VMEM     hbf_scratch: (B_pad, H_pad) bf16 VMEM
    H_pad = h0_ref.shape[1]
    B_pad, E_pad = x_scratch.shape

    @pl.when(pl.program_id(0) == 0)
    def _gru_step():
        # Deterministic padded rows (their h_new / logits rows are sliced off).
        if batch < B_pad:
            x_scratch[pl.ds(batch, B_pad - batch), :] = jnp.zeros(
                (B_pad - batch, E_pad), x_scratch.dtype)

        # True row gather from HBM: one small DMA per *real* batch row only.
        copies = []
        for b in range(batch):
            cp = pltpu.make_async_copy(
                emb_hbm.at[pl.ds(tok_ref[b], 1)],
                x_scratch.at[pl.ds(b, 1)],
                gather_sem.at[b])
            cp.start()
            copies.append(cp)
        for cp in copies:
            cp.wait()

        x = x_scratch[...].astype(jnp.bfloat16)            # (B_pad, E_pad)
        h = h0_ref[...]                                     # (B_pad, H_pad) f32

        # Fused gate matmuls: 2 MXU dots, N-dim = 3*H_pad lanes.
        gi = jnp.dot(x, wih_ref[...],
                     preferred_element_type=jnp.float32) + bih_ref[...]
        gh = jnp.dot(h.astype(jnp.bfloat16), whh_ref[...],
                     preferred_element_type=jnp.float32) + bhh_ref[...]

        # Gate order [r, z, n]; each gate in its own 128-aligned lane slice.
        r = jax.nn.sigmoid(gi[:, 0 * H_pad:1 * H_pad] + gh[:, 0 * H_pad:1 * H_pad])
        z = jax.nn.sigmoid(gi[:, 1 * H_pad:2 * H_pad] + gh[:, 1 * H_pad:2 * H_pad])
        n = jnp.tanh(gi[:, 2 * H_pad:3 * H_pad] + r * gh[:, 2 * H_pad:3 * H_pad])
        h_new = (1.0 - z) * n + z * h

        hnew_ref[...] = h_new                               # written once, flushed at end
        hbf_scratch[...] = h_new.astype(jnp.bfloat16)       # cast once, reused per tile

    # Per-vocab-tile projection (every grid step), bf16 h reused from scratch.
    logits_ref[...] = (
        jnp.dot(hbf_scratch[...], wout_ref[...], preferred_element_type=jnp.float32)
        + bout_ref[...])


# --------------------------------------------------------------------------
# Parameter construction / packing.
# --------------------------------------------------------------------------
def make_params(key, vocab_size, emb_dim, hidden_dim):
    """Logical params, mirroring Decoder._init_weights (PyTorch layouts)."""
    ks = jax.random.split(key, 4)
    orth = jax.nn.initializers.orthogonal()
    xav = jax.nn.initializers.xavier_uniform()
    return dict(
        embed=jax.random.uniform(ks[0], (vocab_size, emb_dim), jnp.float32, -0.1, 0.1),
        w_ih=orth(ks[1], (3 * hidden_dim, emb_dim), jnp.float32),     # (3H, E)
        w_hh=orth(ks[2], (3 * hidden_dim, hidden_dim), jnp.float32),  # (3H, H)
        b_ih=jnp.zeros((3 * hidden_dim,), jnp.float32),
        b_hh=jnp.zeros((3 * hidden_dim,), jnp.float32),
        w_out=xav(ks[3], (vocab_size, hidden_dim), jnp.float32),      # (V, H)
        b_out=jnp.zeros((vocab_size,), jnp.float32),
    )


def pack_params(params, *, max_vocab_tile=4096, batch_hint=8):
    """Pad/fuse/cast logical params into the kernel layout."""
    V, E = params["embed"].shape
    H = params["w_hh"].shape[1]
    E_pad = _round_up(E, 128)
    H_pad = _round_up(H, 128)
    b_pad_hint = _round_up(max(batch_hint, 1), 8)
    tile_v = _pick_tile_v(V, E_pad, H_pad, max_vocab_tile, b_pad_hint)
    V_pad = _round_up(V, tile_v)

    def stack_gates(w, in_dim, in_pad):
        # w: (3H, in_dim) PyTorch layout -> (in_pad, 3*H_pad), bf16
        out = jnp.zeros((in_pad, 3 * H_pad), jnp.float32)
        for g in range(3):
            wg = w[g * H:(g + 1) * H, :]                       # (H, in_dim)
            out = out.at[:in_dim, g * H_pad:g * H_pad + H].set(wg.T)
        return out.astype(jnp.bfloat16)

    def stack_bias(b):
        out = jnp.zeros((1, 3 * H_pad), jnp.float32)
        for g in range(3):
            out = out.at[0, g * H_pad:g * H_pad + H].set(b[g * H:(g + 1) * H])
        return out

    embed = jnp.zeros((V, E_pad), jnp.float32).at[:, :E].set(params["embed"])
    w_out = jnp.zeros((H_pad, V_pad), jnp.bfloat16).at[:H, :V].set(
        params["w_out"].T.astype(jnp.bfloat16))
    b_out = jnp.zeros((1, V_pad), jnp.float32).at[0, :V].set(params["b_out"])

    packed = dict(
        embed=embed,
        w_ih=stack_gates(params["w_ih"], E, E_pad),
        w_hh=stack_gates(params["w_hh"], H, H_pad),
        b_ih=stack_bias(params["b_ih"]),
        b_hh=stack_bias(params["b_hh"]),
        w_out=w_out,
        b_out=b_out,
    )
    meta = dict(V=V, E=E, H=H, V_pad=V_pad, E_pad=E_pad, H_pad=H_pad, tile_v=tile_v)
    return packed, meta


# --------------------------------------------------------------------------
# Forward wrapper (single fused pallas_call).
# --------------------------------------------------------------------------
def decoder_forward(prev_token, hidden, packed, meta):
    """prev_token: (B,) int, hidden: (1, B, H) f32 -> (logits (B,V), hidden (1,B,H))."""
    B = int(prev_token.shape[0])
    H, V = meta["H"], meta["V"]
    E_pad, H_pad, V_pad = meta["E_pad"], meta["H_pad"], meta["V_pad"]
    B_pad = _round_up(max(B, 1), 8)                    # f32 sublane count

    # Generation-aware tile / VMEM sizing.
    vmem_cap = _vmem_capacity_bytes()
    budget = int(0.72 * vmem_cap)
    tile_v = meta["tile_v"]
    while tile_v > 128 and _fused_footprint_bytes(E_pad, H_pad, tile_v, B_pad) > budget:
        tile_v //= 2                                   # power-of-two tiles: stays a divisor
    n_tiles = V_pad // tile_v
    footprint = _fused_footprint_bytes(E_pad, H_pad, tile_v, B_pad)
    vmem_limit = int(min(max(int(1.25 * footprint), 8 * 1024 * 1024),
                         int(0.80 * vmem_cap)))

    tok = jnp.zeros((B_pad,), jnp.int32).at[:B].set(prev_token.astype(jnp.int32))
    h0 = jnp.zeros((B_pad, H_pad), jnp.float32).at[:B, :H].set(hidden[0])

    kernel = functools.partial(_fused_decoder_kernel, B)

    grid_spec = pltpu.PrefetchScalarGridSpec(
        num_scalar_prefetch=1,                          # token ids -> SMEM
        grid=(n_tiles,),
        in_specs=[
            pl.BlockSpec(memory_space=pl.ANY),                          # embed (HBM)
            pl.BlockSpec((E_pad, 3 * H_pad), lambda j, _tok: (0, 0)),   # w_ih (resident)
            pl.BlockSpec((H_pad, 3 * H_pad), lambda j, _tok: (0, 0)),   # w_hh (resident)
            pl.BlockSpec((1, 3 * H_pad), lambda j, _tok: (0, 0)),       # b_ih
            pl.BlockSpec((1, 3 * H_pad), lambda j, _tok: (0, 0)),       # b_hh
            pl.BlockSpec((B_pad, H_pad), lambda j, _tok: (0, 0)),       # h0
            pl.BlockSpec((H_pad, tile_v), lambda j, _tok: (0, j)),      # w_out tile
            pl.BlockSpec((1, tile_v), lambda j, _tok: (0, j)),          # b_out tile
        ],
        out_specs=[
            pl.BlockSpec((B_pad, tile_v), lambda j, _tok: (0, j)),      # logits tile
            pl.BlockSpec((B_pad, H_pad), lambda j, _tok: (0, 0)),       # h_new (resident)
        ],
        scratch_shapes=[
            pltpu.VMEM((B_pad, E_pad), jnp.float32),    # gathered embeddings
            pltpu.VMEM((B_pad, H_pad), jnp.bfloat16),   # bf16 h_new (cast once)
            pltpu.SemaphoreType.DMA((max(B, 1),)),      # one sem per real batch row
        ],
    )

    logits, h_new = pl.pallas_call(
        kernel,
        out_shape=(jax.ShapeDtypeStruct((B_pad, V_pad), jnp.float32),
                   jax.ShapeDtypeStruct((B_pad, H_pad), jnp.float32)),
        grid_spec=grid_spec,
        compiler_params=pltpu.CompilerParams(
            # "arbitrary": the GRU state lives in per-core scratch, and the
            # projection is HBM-BW bound (splitting across TCs adds no chip BW).
            dimension_semantics=("arbitrary",),
            vmem_limit_bytes=vmem_limit),
        cost_estimate=pl.CostEstimate(
            flops=2 * B_pad * (E_pad + H_pad) * 3 * H_pad + 2 * B_pad * H_pad * V_pad,
            transcendentals=3 * B_pad * H_pad,
            bytes_accessed=(B * E_pad * 4
                            + (E_pad + H_pad) * 3 * H_pad * 2
                            + H_pad * V_pad * 2 + V_pad * 4
                            + B_pad * V_pad * 4 + 2 * B_pad * H_pad * 4)),
    )(tok, packed["embed"], packed["w_ih"], packed["w_hh"],
      packed["b_ih"], packed["b_hh"], h0, packed["w_out"], packed["b_out"])

    return logits[:B, :V], h_new[:B, :H][None]


# --------------------------------------------------------------------------
# Pure-JAX reference (same bf16-weight / f32-accumulate semantics).
# --------------------------------------------------------------------------
def decoder_reference(prev_token, hidden, params):
    x = params["embed"][prev_token]                       # (B, E)
    h = hidden[0]                                         # (B, H)
    H = h.shape[1]
    w_ih = params["w_ih"].astype(jnp.bfloat16)
    w_hh = params["w_hh"].astype(jnp.bfloat16)
    gi = jnp.dot(x.astype(jnp.bfloat16), w_ih.T,
                 preferred_element_type=jnp.float32) + params["b_ih"]
    gh = jnp.dot(h.astype(jnp.bfloat16), w_hh.T,
                 preferred_element_type=jnp.float32) + params["b_hh"]
    r = jax.nn.sigmoid(gi[:, :H] + gh[:, :H])
    z = jax.nn.sigmoid(gi[:, H:2 * H] + gh[:, H:2 * H])
    n = jnp.tanh(gi[:, 2 * H:] + r * gh[:, 2 * H:])
    h_new = (1.0 - z) * n + z * h
    logits = jnp.dot(h_new.astype(jnp.bfloat16),
                     params["w_out"].T.astype(jnp.bfloat16),
                     preferred_element_type=jnp.float32) + params["b_out"]
    return logits, h_new[None]


def _run_case(key, vocab_size, emb_dim, hidden_dim, batch, max_vocab_tile):
    k_param, k_tok, k_hid = jax.random.split(key, 3)
    params = make_params(k_param, vocab_size, emb_dim, hidden_dim)
    packed, meta = pack_params(params, max_vocab_tile=max_vocab_tile, batch_hint=batch)

    prev_token = jax.random.randint(k_tok, (batch,), 0, vocab_size, dtype=jnp.int32)
    hidden = jax.random.normal(k_hid, (1, batch, hidden_dim), jnp.float32)

    logits, h_new = decoder_forward(prev_token, hidden, packed, meta)
    jax.block_until_ready((logits, h_new))

    ref_logits, ref_h = decoder_reference(prev_token, hidden, params)
    assert logits.shape == (batch, vocab_size)
    assert h_new.shape == (1, batch, hidden_dim)
    assert jnp.allclose(logits, ref_logits, atol=2e-3, rtol=2e-3), \
        float(jnp.max(jnp.abs(logits - ref_logits)))
    assert jnp.allclose(h_new, ref_h, atol=2e-3, rtol=2e-3), \
        float(jnp.max(jnp.abs(h_new - ref_h)))


if __name__ == "__main__":
    key = jax.random.PRNGKey(0)
    k1, k2 = jax.random.split(key)

    # Case 1: module-default small shapes (single vocab tile).
    _run_case(k1, vocab_size=64, emb_dim=16, hidden_dim=32, batch=4,
              max_vocab_tile=4096)

    # Case 2: multi-tile vocab grid (exercises pl.when gating + scratch
    # persistence across grid steps) with a padded batch (5 -> 8 rows).
    _run_case(k2, vocab_size=300, emb_dim=24, hidden_dim=48, batch=5,
              max_vocab_tile=128)

    print("KERNEL_OK")
</pallas_src>

<mosaic_0001>
module attributes {stable_mosaic.version = 11 : i64} {
  func.func @_fused_decoder_kernel(%arg0: i32, %arg1: memref<8xi32, #tpu.memory_space<smem>>, %arg2: memref<64x128xf32, #tpu.memory_space<any>>, %arg3: memref<128x384xbf16, #tpu.memory_space<vmem>>, %arg4: memref<128x384xbf16, #tpu.memory_space<vmem>>, %arg5: memref<1x384xf32, #tpu.memory_space<vmem>>, %arg6: memref<1x384xf32, #tpu.memory_space<vmem>>, %arg7: memref<8x128xf32, #tpu.memory_space<vmem>>, %arg8: memref<128x128xbf16, #tpu.memory_space<vmem>>, %arg9: memref<1x128xf32, #tpu.memory_space<vmem>>, %arg10: memref<8x128xf32, #tpu.memory_space<vmem>>, %arg11: memref<8x128xf32, #tpu.memory_space<vmem>>, %arg12: memref<8x128xf32, #tpu.memory_space<vmem>>, %arg13: memref<8x128xbf16, #tpu.memory_space<vmem>>, %arg14: memref<4x!tpu.dma_semaphore, #tpu.memory_space<semaphore_mem>>) attributes {dimension_semantics = [#tpu.dimension_semantics<arbitrary>], iteration_bounds = array<i64: 1>, scalar_prefetch = 1 : i64, scratch_operands = 3 : i64, tpu.core_type = #tpu.core_type<tc>, window_params = [{}, {pipeline_mode = #tpu.pipeline_mode<synchronous>, transform_indices = @transform_1, window_bounds = array<i64: 128, 384>}, {pipeline_mode = #tpu.pipeline_mode<synchronous>, transform_indices = @transform_2, window_bounds = array<i64: 128, 384>}, {pipeline_mode = #tpu.pipeline_mode<synchronous>, transform_indices = @transform_3, window_bounds = array<i64: 1, 384>}, {pipeline_mode = #tpu.pipeline_mode<synchronous>, transform_indices = @transform_4, window_bounds = array<i64: 1, 384>}, {pipeline_mode = #tpu.pipeline_mode<synchronous>, transform_indices = @transform_5, window_bounds = array<i64: 8, 128>}, {transform_indices = @transform_6, window_bounds = array<i64: 128, 128>}, {transform_indices = @transform_7, window_bounds = array<i64: 1, 128>}, {transform_indices = @transform_8, window_bounds = array<i64: 8, 128>}, {pipeline_mode = #tpu.pipeline_mode<synchronous>, transform_indices = @transform_9, window_bounds = array<i64: 8, 128>}]} {
    %c0_i32 = arith.constant 0 : i32
    %0 = arith.cmpi eq, %arg0, %c0_i32 : i32
    %1 = arith.extui %0 : i1 to i32
    %c0_i32_0 = arith.constant 0 : i32
    %2 = arith.cmpi ne, %1, %c0_i32_0 : i32
    scf.if %2 {
      %cst_8 = arith.constant 0.000000e+00 : f32
      %10 = vector.broadcast %cst_8 : f32 to vector<4x128xf32>
      %c4 = arith.constant 4 : index
      %c0_9 = arith.constant 0 : index
      %11 = vector.load %arg12[%c4, %c0_9] : memref<8x128xf32, #tpu.memory_space<vmem>>, vector<4x128xf32>
      tpu.vector_store %arg12[%c4, %c0_9], %10 {strides = array<i32>} : memref<8x128xf32, #tpu.memory_space<vmem>>, vector<4x128xf32>,
      %c0_10 = arith.constant 0 : index
      %12 = memref.load %arg1[%c0_10] : memref<8xi32, #tpu.memory_space<smem>>
      %c0_i32_11 = arith.constant 0 : i32
      %c0_i32_12 = arith.constant 0 : i32
      %13 = tpu.memref_slice %arg2[%12, %c0_i32_12] : memref<64x128xf32, #tpu.memory_space<any>> -> memref<1x128xf32, #tpu.memory_space<any>>
      %c0_i32_13 = arith.constant 0 : i32
      %c0_i32_14 = arith.constant 0 : i32
      %14 = tpu.memref_slice %arg12[%c0_i32_13, %c0_i32_14] : memref<8x128xf32, #tpu.memory_space<vmem>> -> memref<1x128xf32, #tpu.memory_space<vmem>>
      %15 = tpu.memref_slice %arg14[%c0_i32_11] : memref<4x!tpu.dma_semaphore, #tpu.memory_space<semaphore_mem>> -> memref<1x!tpu.dma_semaphore, #tpu.memory_space<semaphore_mem>>
      %16 = tpu.memref_squeeze %15 : memref<1x!tpu.dma_semaphore, #tpu.memory_space<semaphore_mem>> -> memref<!tpu.dma_semaphore, #tpu.memory_space<semaphore_mem>>
      tpu.enqueue_dma source(%13 : memref<1x128xf32, #tpu.memory_space<any>>) target(%14 : memref<1x128xf32, #tpu.memory_space<vmem>>) target_semaphore(%16 : memref<!tpu.dma_semaphore, #tpu.memory_space<semaphore_mem>>)
      %c1 = arith.constant 1 : index
      %17 = memref.load %arg1[%c1] : memref<8xi32, #tpu.memory_space<smem>>
      %c1_i32 = arith.constant 1 : i32
      %c0_i32_15 = arith.constant 0 : i32
      %18 = tpu.memref_slice %arg2[%17, %c0_i32_15] : memref<64x128xf32, #tpu.memory_space<any>> -> memref<1x128xf32, #tpu.memory_space<any>>
      %c1_i32_16 = arith.constant 1 : i32
      %c0_i32_17 = arith.constant 0 : i32
      %19 = tpu.memref_slice %arg12[%c1_i32_16, %c0_i32_17] : memref<8x128xf32, #tpu.memory_space<vmem>> -> memref<1x128xf32, #tpu.memory_space<vmem>>
      %20 = tpu.memref_slice %arg14[%c1_i32] : memref<4x!tpu.dma_semaphore, #tpu.memory_space<semaphore_mem>> -> memref<1x!tpu.dma_semaphore, #tpu.memory_space<semaphore_mem>>
      %21 = tpu.memref_squeeze %20 : memref<1x!tpu.dma_semaphore, #tpu.memory_space<semaphore_mem>> -> memref<!tpu.dma_semaphore, #tpu.memory_space<semaphore_mem>>
      tpu.enqueue_dma source(%18 : memref<1x128xf32, #tpu.memory_space<any>>) target(%19 : memref<1x128xf32, #tpu.memory_space<vmem>>) target_semaphore(%21 : memref<!tpu.dma_semaphore, #tpu.memory_space<semaphore_mem>>)
      %c2 = arith.constant 2 : index
      %22 = memref.load %arg1[%c2] : memref<8xi32, #tpu.memory_space<smem>>
      %c2_i32 = arith.constant 2 : i32
      %c0_i32_18 = arith.constant 0 : i32
      %23 = tpu.memref_slice %arg2[%22, %c0_i32_18] : memref<64x128xf32, #tpu.memory_space<any>> -> memref<1x128xf32, #tpu.memory_space<any>>
      %c2_i32_19 = arith.constant 2 : i32
      %c0_i32_20 = arith.constant 0 : i32
      %24 = tpu.memref_slice %arg12[%c2_i32_19, %c0_i32_20] : memref<8x128xf32, #tpu.memory_space<vmem>> -> memref<1x128xf32, #tpu.memory_space<vmem>>
      %25 = tpu.memref_slice %arg14[%c2_i32] : memref<4x!tpu.dma_semaphore, #tpu.memory_space<semaphore_mem>> -> memref<1x!tpu.dma_semaphore, #tpu.memory_space<semaphore_mem>>
      %26 = tpu.memref_squeeze %25 : memref<1x!tpu.dma_semaphore, #tpu.memory_space<semaphore_mem>> -> memref<!tpu.dma_semaphore, #tpu.memory_space<semaphore_mem>>
      tpu.enqueue_dma source(%23 : memref<1x128xf32, #tpu.memory_space<any>>) target(%24 : memref<1x128xf32, #tpu.memory_space<vmem>>) target_semaphore(%26 : memref<!tpu.dma_semaphore, #tpu.memory_space<semaphore_mem>>)
      %c3 = arith.constant 3 : index
      %27 = memref.load %arg1[%c3] : memref<8xi32, #tpu.memory_space<smem>>
      %c3_i32 = arith.constant 3 : i32
      %c0_i32_21 = arith.constant 0 : i32
      %28 = tpu.memref_slice %arg2[%27, %c0_i32_21] : memref<64x128xf32, #tpu.memory_space<any>> -> memref<1x128xf32, #tpu.memory_space<any>>
      %c3_i32_22 = arith.constant 3 : i32
      %c0_i32_23 = arith.constant 0 : i32
      %29 = tpu.memref_slice %arg12[%c3_i32_22, %c0_i32_23] : memref<8x128xf32, #tpu.memory_space<vmem>> -> memref<1x128xf32, #tpu.memory_space<vmem>>
      %30 = tpu.memref_slice %arg14[%c3_i32] : memref<4x!tpu.dma_semaphore, #tpu.memory_space<semaphore_mem>> -> memref<1x!tpu.dma_semaphore, #tpu.memory_space<semaphore_mem>>
      %31 = tpu.memref_squeeze %30 : memref<1x!tpu.dma_semaphore, #tpu.memory_space<semaphore_mem>> -> memref<!tpu.dma_semaphore, #tpu.memory_space<semaphore_mem>>
      tpu.enqueue_dma source(%28 : memref<1x128xf32, #tpu.memory_space<any>>) target(%29 : memref<1x128xf32, #tpu.memory_space<vmem>>) target_semaphore(%31 : memref<!tpu.dma_semaphore, #tpu.memory_space<semaphore_mem>>)
      %c0_i32_24 = arith.constant 0 : i32
      %c0_i32_25 = arith.constant 0 : i32
      %32 = tpu.memref_slice %arg2[%12, %c0_i32_25] : memref<64x128xf32, #tpu.memory_space<any>> -> memref<1x128xf32, #tpu.memory_space<any>>
      %c0_i32_26 = arith.constant 0 : i32
      %c0_i32_27 = arith.constant 0 : i32
      %33 = tpu.memref_slice %arg12[%c0_i32_26, %c0_i32_27] : memref<8x128xf32, #tpu.memory_space<vmem>> -> memref<1x128xf32, #tpu.memory_space<vmem>>
      %34 = tpu.memref_slice %arg14[%c0_i32_24] : memref<4x!tpu.dma_semaphore, #tpu.memory_space<semaphore_mem>> -> memref<1x!tpu.dma_semaphore, #tpu.memory_space<semaphore_mem>>
      %35 = tpu.memref_squeeze %34 : memref<1x!tpu.dma_semaphore, #tpu.memory_space<semaphore_mem>> -> memref<!tpu.dma_semaphore, #tpu.memory_space<semaphore_mem>>
      tpu.wait_dma2 semaphore(%35 : memref<!tpu.dma_semaphore, #tpu.memory_space<semaphore_mem>>) src(%32 : memref<1x128xf32, #tpu.memory_space<any>>) dst(%33 : memref<1x128xf32, #tpu.memory_space<vmem>>)
      %c1_i32_28 = arith.constant 1 : i32
      %c0_i32_29 = arith.constant 0 : i32
      %36 = tpu.memref_slice %arg2[%17, %c0_i32_29] : memref<64x128xf32, #tpu.memory_space<any>> -> memref<1x128xf32, #tpu.memory_space<any>>
      %c1_i32_30 = arith.constant 1 : i32
      %c0_i32_31 = arith.constant 0 : i32
      %37 = tpu.memref_slice %arg12[%c1_i32_30, %c0_i32_31] : memref<8x128xf32, #tpu.memory_space<vmem>> -> memref<1x128xf32, #tpu.memory_space<vmem>>
      %38 = tpu.memref_slice %arg14[%c1_i32_28] : memref<4x!tpu.dma_semaphore, #tpu.memory_space<semaphore_mem>> -> memref<1x!tpu.dma_semaphore, #tpu.memory_space<semaphore_mem>>
      %39 = tpu.memref_squeeze %38 : memref<1x!tpu.dma_semaphore, #tpu.memory_space<semaphore_mem>> -> memref<!tpu.dma_semaphore, #tpu.memory_space<semaphore_mem>>
      tpu.wait_dma2 semaphore(%39 : memref<!tpu.dma_semaphore, #tpu.memory_space<semaphore_mem>>) src(%36 : memref<1x128xf32, #tpu.memory_space<any>>) dst(%37 : memref<1x128xf32, #tpu.memory_space<vmem>>)
      %c2_i32_32 = arith.constant 2 : i32
      %c0_i32_33 = arith.constant 0 : i32
      %40 = tpu.memref_slice %arg2[%22, %c0_i32_33] : memref<64x128xf32, #tpu.memory_space<any>> -> memref<1x128xf32, #tpu.memory_space<any>>
      %c2_i32_34 = arith.constant 2 : i32
      %c0_i32_35 = arith.constant 0 : i32
      %41 = tpu.memref_slice %arg12[%c2_i32_34, %c0_i32_35] : memref<8x128xf32, #tpu.memory_space<vmem>> -> memref<1x128xf32, #tpu.memory_space<vmem>>
      %42 = tpu.memref_slice %arg14[%c2_i32_32] : memref<4x!tpu.dma_semaphore, #tpu.memory_space<semaphore_mem>> -> memref<1x!tpu.dma_semaphore, #tpu.memory_space<semaphore_mem>>
      %43 = tpu.memref_squeeze %42 : memref<1x!tpu.dma_semaphore, #tpu.memory_space<semaphore_mem>> -> memref<!tpu.dma_semaphore, #tpu.memory_space<semaphore_mem>>
      tpu.wait_dma2 semaphore(%43 : memref<!tpu.dma_semaphore, #tpu.memory_space<semaphore_mem>>) src(%40 : memref<1x128xf32, #tpu.memory_space<any>>) dst(%41 : memref<1x128xf32, #tpu.memory_space<vmem>>)
      %c3_i32_36 = arith.constant 3 : i32
      %c0_i32_37 = arith.constant 0 : i32
      %44 = tpu.memref_slice %arg2[%27, %c0_i32_37] : memref<64x128xf32, #tpu.memory_space<any>> -> memref<1x128xf32, #tpu.memory_space<any>>
      %c3_i32_38 = arith.constant 3 : i32
      %c0_i32_39 = arith.constant 0 : i32
      %45 = tpu.memref_slice %arg12[%c3_i32_38, %c0_i32_39] : memref<8x128xf32, #tpu.memory_space<vmem>> -> memref<1x128xf32, #tpu.memory_space<vmem>>
      %46 = tpu.memref_slice %arg14[%c3_i32_36] : memref<4x!tpu.dma_semaphore, #tpu.memory_space<semaphore_mem>> -> memref<1x!tpu.dma_semaphore, #tpu.memory_space<semaphore_mem>>
      %47 = tpu.memref_squeeze %46 : memref<1x!tpu.dma_semaphore, #tpu.memory_space<semaphore_mem>> -> memref<!tpu.dma_semaphore, #tpu.memory_space<semaphore_mem>>
      tpu.wait_dma2 semaphore(%47 : memref<!tpu.dma_semaphore, #tpu.memory_space<semaphore_mem>>) src(%44 : memref<1x128xf32, #tpu.memory_space<any>>) dst(%45 : memref<1x128xf32, #tpu.memory_space<vmem>>)
      %c0_40 = arith.constant 0 : index
      %c0_41 = arith.constant 0 : index
      %48 = vector.load %arg12[%c0_40, %c0_41] : memref<8x128xf32, #tpu.memory_space<vmem>>, vector<8x128xf32>
      %49 = arith.truncf %48 : vector<8x128xf32> to vector<8x128xbf16>
      %c0_42 = arith.constant 0 : index
      %c0_43 = arith.constant 0 : index
      %50 = vector.load %arg7[%c0_42, %c0_43] : memref<8x128xf32, #tpu.memory_space<vmem>>, vector<8x128xf32>
      %c0_44 = arith.constant 0 : index
      %c0_45 = arith.constant 0 : index
      %51 = vector.load %arg3[%c0_44, %c0_45] : memref<128x384xbf16, #tpu.memory_space<vmem>>, vector<128x384xbf16>
      %cst_46 = arith.constant dense<0.000000e+00> : vector<8x384xf32>
      %52 = tpu.matmul %49, %51, %cst_46 {dimension_numbers = #tpu.dot_dimension_numbers<[1], [0], [0], [1], [0, 0, 1, 1], [], []>} : vector<8x128xbf16>, vector<128x384xbf16>, vector<8x384xf32> -> vector<8x384xf32>
      %c0_47 = arith.constant 0 : index
      %c0_48 = arith.constant 0 : index
      %53 = vector.load %arg5[%c0_47, %c0_48] : memref<1x384xf32, #tpu.memory_space<vmem>>, vector<1x384xf32>
      %54 = vector.broadcast %53 : vector<1x384xf32> to vector<8x384xf32>
      %55 = arith.addf %52, %54 : vector<8x384xf32>
      %56 = arith.truncf %50 : vector<8x128xf32> to vector<8x128xbf16>
      %c0_49 = arith.constant 0 : index
      %c0_50 = arith.constant 0 : index
      %57 = vector.load %arg4[%c0_49, %c0_50] : memref<128x384xbf16, #tpu.memory_space<vmem>>, vector<128x384xbf16>
      %cst_51 = arith.constant dense<0.000000e+00> : vector<8x384xf32>
      %58 = tpu.matmul %56, %57, %cst_51 {dimension_numbers = #tpu.dot_dimension_numbers<[1], [0], [0], [1], [0, 0, 1, 1], [], []>} : vector<8x128xbf16>, vector<128x384xbf16>, vector<8x384xf32> -> vector<8x384xf32>
      %c0_52 = arith.constant 0 : index
      %c0_53 = arith.constant 0 : index
      %59 = vector.load %arg6[%c0_52, %c0_53] : memref<1x384xf32, #tpu.memory_space<vmem>>, vector<1x384xf32>
      %60 = vector.broadcast %59 : vector<1x384xf32> to vector<8x384xf32>
      %61 = arith.addf %58, %60 : vector<8x384xf32>
      %62 = vector.extract_strided_slice %55 {offsets = [0, 0], sizes = [8, 128], strides = [1, 1]} : vector<8x384xf32> to vector<8x128xf32>
      %63 = vector.extract_strided_slice %61 {offsets = [0, 0], sizes = [8, 128], strides = [1, 1]} : vector<8x384xf32> to vector<8x128xf32>
      %64 = arith.addf %62, %63 : vector<8x128xf32>
      %65 = arith.negf %64 : vector<8x128xf32>
      %66 = math.exp %65 : vector<8x128xf32>
      %cst_54 = arith.constant 1.000000e+00 : f32
      %67 = vector.broadcast %cst_54 : f32 to vector<8x128xf32>
      %68 = arith.addf %67, %66 : vector<8x128xf32>
      %69 = arith.divf %67, %68 : vector<8x128xf32>
      %70 = vector.extract_strided_slice %55 {offsets = [0, 128], sizes = [8, 128], strides = [1, 1]} : vector<8x384xf32> to vector<8x128xf32>
      %71 = vector.extract_strided_slice %61 {offsets = [0, 128], sizes = [8, 128], strides = [1, 1]} : vector<8x384xf32> to vector<8x128xf32>
      %72 = arith.addf %70, %71 : vector<8x128xf32>
      %73 = arith.negf %72 : vector<8x128xf32>
      %74 = math.exp %73 : vector<8x128xf32>
      %cst_55 = arith.constant 1.000000e+00 : f32
      %75 = vector.broadcast %cst_55 : f32 to vector<8x128xf32>
      %76 = arith.addf %75, %74 : vector<8x128xf32>
      %77 = arith.divf %75, %76 : vector<8x128xf32>
      %78 = vector.extract_strided_slice %55 {offsets = [0, 256], sizes = [8, 128], strides = [1, 1]} : vector<8x384xf32> to vector<8x128xf32>
      %79 = vector.extract_strided_slice %61 {offsets = [0, 256], sizes = [8, 128], strides = [1, 1]} : vector<8x384xf32> to vector<8x128xf32>
      %80 = arith.mulf %69, %79 : vector<8x128xf32>
      %81 = arith.addf %78, %80 : vector<8x128xf32>
      %82 = math.tanh %81 : vector<8x128xf32>
      %cst_56 = arith.constant 1.000000e+00 : f32
      %83 = vector.broadcast %cst_56 : f32 to vector<8x128xf32>
      %84 = arith.subf %83, %77 : vector<8x128xf32>
      %85 = arith.mulf %84, %82 : vector<8x128xf32>
      %86 = arith.mulf %77, %50 : vector<8x128xf32>
      %87 = arith.addf %85, %86 : vector<8x128xf32>
      %c0_57 = arith.constant 0 : index
      %c0_58 = arith.constant 0 : index
      %88 = vector.load %arg11[%c0_57, %c0_58] : memref<8x128xf32, #tpu.memory_space<vmem>>, vector<8x128xf32>
      tpu.vector_store %arg11[%c0_57, %c0_58], %87 {strides = array<i32>} : memref<8x128xf32, #tpu.memory_space<vmem>>, vector<8x128xf32>,
      %89 = arith.truncf %87 : vector<8x128xf32> to vector<8x128xbf16>
      %c0_59 = arith.constant 0 : index
      %c0_60 = arith.constant 0 : index
      %90 = vector.load %arg13[%c0_59, %c0_60] : memref<8x128xbf16, #tpu.memory_space<vmem>>, vector<8x128xbf16>
      tpu.vector_store %arg13[%c0_59, %c0_60], %89 {strides = array<i32>} : memref<8x128xbf16, #tpu.memory_space<vmem>>, vector<8x128xbf16>,
    } else {
    }
    %c0 = arith.constant 0 : index
    %c0_1 = arith.constant 0 : index
    %3 = vector.load %arg13[%c0, %c0_1] : memref<8x128xbf16, #tpu.memory_space<vmem>>, vector<8x128xbf16>
    %c0_2 = arith.constant 0 : index
    %c0_3 = arith.constant 0 : index
    %4 = vector.load %arg8[%c0_2, %c0_3] : memref<128x128xbf16, #tpu.memory_space<vmem>>, vector<128x128xbf16>
    %cst = arith.constant dense<0.000000e+00> : vector<8x128xf32>
    %5 = tpu.matmul %3, %4, %cst {dimension_numbers = #tpu.dot_dimension_numbers<[1], [0], [0], [1], [0, 0, 1, 1], [], []>} : vector<8x128xbf16>, vector<128x128xbf16>, vector<8x128xf32> -> vector<8x128xf32>
    %c0_4 = arith.constant 0 : index
    %c0_5 = arith.constant 0 : index
    %6 = vector.load %arg9[%c0_4, %c0_5] : memref<1x128xf32, #tpu.memory_space<vmem>>, vector<1x128xf32>
    %7 = vector.broadcast %6 : vector<1x128xf32> to vector<8x128xf32>
    %8 = arith.addf %5, %7 : vector<8x128xf32>
    %c0_6 = arith.constant 0 : index
    %c0_7 = arith.constant 0 : index
    %9 = vector.load %arg10[%c0_6, %c0_7] : memref<8x128xf32, #tpu.memory_space<vmem>>, vector<8x128xf32>
    tpu.vector_store %arg10[%c0_6, %c0_7], %8 {strides = array<i32>} : memref<8x128xf32, #tpu.memory_space<vmem>>, vector<8x128xf32>,
    return
  }
  func.func @transform_1(%arg0: i32, %arg1: memref<8xi32, #tpu.memory_space<smem>>) -> (i32, i32) {
    %c0_i32 = arith.constant 0 : i32
    %c0_i32_0 = arith.constant 0 : i32
    %c0_i32_1 = arith.constant 0 : i32
    return %c0_i32, %c0_i32_0 : i32, i32
  }
  func.func @transform_2(%arg0: i32, %arg1: memref<8xi32, #tpu.memory_space<smem>>) -> (i32, i32) {
    %c0_i32 = arith.constant 0 : i32
    %c0_i32_0 = arith.constant 0 : i32
    %c0_i32_1 = arith.constant 0 : i32
    return %c0_i32, %c0_i32_0 : i32, i32
  }
  func.func @transform_3(%arg0: i32, %arg1: memref<8xi32, #tpu.memory_space<smem>>) -> (i32, i32) {
    %c0_i32 = arith.constant 0 : i32
    %c0_i32_0 = arith.constant 0 : i32
    %c0_i32_1 = arith.constant 0 : i32
    return %c0_i32, %c0_i32_0 : i32, i32
  }
  func.func @transform_4(%arg0: i32, %arg1: memref<8xi32, #tpu.memory_space<smem>>) -> (i32, i32) {
    %c0_i32 = arith.constant 0 : i32
    %c0_i32_0 = arith.constant 0 : i32
    %c0_i32_1 = arith.constant 0 : i32
    return %c0_i32, %c0_i32_0 : i32, i32
  }
  func.func @transform_5(%arg0: i32, %arg1: memref<8xi32, #tpu.memory_space<smem>>) -> (i32, i32) {
    %c0_i32 = arith.constant 0 : i32
    %c0_i32_0 = arith.constant 0 : i32
    %c0_i32_1 = arith.constant 0 : i32
    return %c0_i32, %c0_i32_0 : i32, i32
  }
  func.func @transform_6(%arg0: i32, %arg1: memref<8xi32, #tpu.memory_space<smem>>) -> (i32, i32) {
    %c0_i32 = arith.constant 0 : i32
    %c0_i32_0 = arith.constant 0 : i32
    return %c0_i32, %arg0 : i32, i32
  }
  func.func @transform_7(%arg0: i32, %arg1: memref<8xi32, #tpu.memory_space<smem>>) -> (i32, i32) {
    %c0_i32 = arith.constant 0 : i32
    %c0_i32_0 = arith.constant 0 : i32
    return %c0_i32, %arg0 : i32, i32
  }
  func.func @transform_8(%arg0: i32, %arg1: memref<8xi32, #tpu.memory_space<smem>>) -> (i32, i32) {
    %c0_i32 = arith.constant 0 : i32
    %c0_i32_0 = arith.constant 0 : i32
    return %c0_i32, %arg0 : i32, i32
  }
  func.func @transform_9(%arg0: i32, %arg1: memref<8xi32, #tpu.memory_space<smem>>) -> (i32, i32) {
    %c0_i32 = arith.constant 0 : i32
    %c0_i32_0 = arith.constant 0 : i32
    %c0_i32_1 = arith.constant 0 : i32
    return %c0_i32, %c0_i32_0 : i32, i32
  }
}

</mosaic_0001>

<llo_original>
// kernel: tpu_custom_call.1
$region0: #{tpu_custom_call.1}
  #allocation0 [shape = 'u32[]', space=smem, size = 0x4, offset = 0x4, fixed_abs, tag = 'smem constant byte address 0x4 - core index']
  #allocation1 [shape = 'u32[144,128]{1,0:T(1,128)}', space=vmem, size = 0x12000, scoped, tag = 'internal scratch']
  #allocation2 [shape = 'f32[8,128]{1,0:T(8,128)}', space=vmem, size = 0x1000, scoped, tag = 'scratch operand']
  #allocation3 [shape = 'bf16[8,128]{1,0:T(8,128)(2,1)}', space=vmem, size = 0x800, scoped, tag = 'scratch operand']
  #allocation4 [shape = 's32[4]{0}', space=sflag, size = 0x10, scoped, tag = 'scratch operand']
  #allocation5 [shape = 's32[1]{0}', space=sflag, size = 0x4, scoped, tag = 'scoped memory for tpu_custom_call.1']
  #allocation6 [shape = 'u8[512]{0}', space=smem, size = 0x200, scoped, tag = 'prefetched SMEM operand 0']
  #allocation16 [shape = 's32[]', space=sflag, size = 0x4, offset = 0, fixed_abs, tag = 'sflag constant byte address 0x0 - dummy sync flag']
  #allocation17 [shape = 's32[]', space=sflag, size = 0x4, offset = 0, fixed_abs, tag = 'sflag constant byte address 0x0 - dummy sync flag']
  #allocation18 [shape = 'u32[]', space=smem, size = 0x4, offset = 0x44, fixed_abs, tag = 'smem constant byte address 0x44 - assertion arg 0']
  #allocation19 [shape = 'u32[]', space=smem, size = 0x4, offset = 0x48, fixed_abs, tag = 'smem constant byte address 0x48 - assertion arg 1']
  #allocation20 [shape = 's32[]', space=sflag, size = 0x4, offset = 0, fixed_abs, tag = 'sflag constant byte address 0x0 - dummy sync flag']
  #allocation21 [shape = 's32[]', space=sflag, size = 0x4, offset = 0, fixed_abs, tag = 'sflag constant byte address 0x0 - dummy sync flag']
  #allocation22 [shape = 's32[]', space=sflag, size = 0x4, offset = 0, fixed_abs, tag = 'sflag constant byte address 0x0 - dummy sync flag']
  #allocation23 [shape = 's32[]', space=sflag, size = 0x4, offset = 0, fixed_abs, tag = 'sflag constant byte address 0x0 - dummy sync flag']
  #allocation24 [shape = 's32[]', space=sflag, size = 0x4, offset = 0, fixed_abs, tag = 'sflag constant byte address 0x0 - dummy sync flag']
  #allocation25 [shape = 's32[]', space=sflag, size = 0x4, offset = 0, fixed_abs, tag = 'sflag constant byte address 0x0 - dummy sync flag']
  %s0 = inlined_call_operand.hbm [shape: s32[8], index: 0, kind: input, shape index: {}]
  %s1 = inlined_call_operand.hbm [shape: f32[64,128], index: 1, kind: input, shape index: {}]
  %s2 = inlined_call_operand.hbm [shape: bf16[128,384], index: 2, kind: input, shape index: {}]
  %s3 = inlined_call_operand.hbm [shape: bf16[128,384], index: 3, kind: input, shape index: {}]
  %s4 = inlined_call_operand.vmem [shape: f32[1,384], index: 4, kind: input, shape index: {}]
  %s5 = inlined_call_operand.vmem [shape: f32[1,384], index: 5, kind: input, shape index: {}]
  %s6 = inlined_call_operand.vmem [shape: f32[8,128], index: 6, kind: input, shape index: {}]
  %s7 = inlined_call_operand.hbm [shape: bf16[128,128], index: 7, kind: input, shape index: {}]
  %s8 = inlined_call_operand.vmem [shape: f32[1,128], index: 8, kind: input, shape index: {}]
  %s9 = inlined_call_operand.hbm [shape: f32[8,128], index: 9, kind: output, shape index: {0}]
  %s10 = inlined_call_operand.hbm [shape: f32[8,128], index: 10, kind: output, shape index: {1}]
  %11 = xla_tuple %s9, %s10
  %s12 = sld [smem:[#allocation0]]
  $region78: #{tpu_custom_call.1} parent=0
    _
  %s14 = ssub.s32 1, %s12
  %s15 = scalar_select 0, %s14, %s12
  %17 = dma.hbm_to_smem %s0, 16, [#allocation6], [#allocation5]
  %18 = dma.done [#allocation5], 16
  %19 = sfence
  $region1: #{tpu_custom_call.1} parent=0
    #allocation7 [shape = 'u8[98304]{0}', space=vmem, size = 0x18000, scoped, tag = 'input window, operand 2, single buffered']
    #allocation8 [shape = 's32[1]{0}', space=sflag, size = 0x4, scoped, tag = 'scoped memory for tpu_custom_call.1']
    #allocation9 [shape = 's32[1]{0}', space=sflag, size = 0x4, scoped, tag = 'scoped memory for tpu_custom_call.1']
    #allocation10 [shape = 'u8[98304]{0}', space=vmem, size = 0x18000, scoped, tag = 'input window, operand 3, single buffered']
    #allocation11 [shape = 's32[1]{0}', space=sflag, size = 0x4, scoped, tag = 'scoped memory for tpu_custom_call.1']
    #allocation12 [shape = 'u8[32768]{0}', space=vmem, size = 0x8000, scoped, tag = 'input window, operand 7, single buffered']
    #allocation13 [shape = 'u8[4096]{0}', space=vmem, size = 0x1000, scoped, tag = 'output window, operand 0, single buffered']
    #allocation14 [shape = 'u8[4096]{0}', space=vmem, size = 0x1000, scoped, tag = 'output window, operand 1, single buffered']
    #allocation15 [shape = 's32[1]{0}', space=sflag, size = 0x4, scoped, tag = 'scoped memory for tpu_custom_call.1']
    %20 = vsyncpa [#allocation8], 0
    %21 = vsyncpa [#allocation11], 0
    %22 = vsyncpa [#allocation9], 0
    %23 = vsyncpa [#allocation15], 0
    // Predicated region
    $region2: #{tpu_custom_call.1} parent=1 // pred_check
      _
    $region3: #{tpu_custom_call.1} parent=1 // pred_check_branch
      %25 = sbr.rel (0) target = $region5
    $region4: #{tpu_custom_call.1} parent=1 // pred_region
      %s27 = ssub.s32 3072, 3072
      %28 = vsyncadd [#allocation8], %s27
      %s29 = sshll.u32 [#allocation7], 4
      %s30 = int_to_ptr.vmem [resolvable:$true] %s29
      %35 = dma.hbm_to_vmem [thread:$0]  %s2, 3072, %s30, [#allocation8], 192, 192, 12
    $region5: #{tpu_custom_call.1} parent=1 // pred_fallthru
      _
    // Predicated region
    $region6: #{tpu_custom_call.1} parent=1 // pred_check
      _
    $region7: #{tpu_custom_call.1} parent=1 // pred_check_branch
      %37 = sbr.rel (0) target = $region9
    $region8: #{tpu_custom_call.1} parent=1 // pred_region
      %s39 = ssub.s32 3072, 3072
      %40 = vsyncadd [#allocation11], %s39
      %s41 = sshll.u32 [#allocation10], 4
      %s42 = int_to_ptr.vmem [resolvable:$true] %s41
      %47 = dma.hbm_to_vmem [thread:$0]  %s3, 3072, %s42, [#allocation11], 192, 192, 12
    $region9: #{tpu_custom_call.1} parent=1 // pred_fallthru
      _
    // Predicated region
    $region10: #{tpu_custom_call.1} parent=1 // pred_check
      _
    $region11: #{tpu_custom_call.1} parent=1 // pred_check_branch
      %49 = sbr.rel (0) target = $region13
    $region12: #{tpu_custom_call.1} parent=1 // pred_region
      _
    $region13: #{tpu_custom_call.1} parent=1 // pred_fallthru
      _
    // Predicated region
    $region14: #{tpu_custom_call.1} parent=1 // pred_check
      _
    $region15: #{tpu_custom_call.1} parent=1 // pred_check_branch
      %51 = sbr.rel (0) target = $region17
    $region16: #{tpu_custom_call.1} parent=1 // pred_region
      _
    $region17: #{tpu_custom_call.1} parent=1 // pred_fallthru
      _
    // Predicated region
    $region18: #{tpu_custom_call.1} parent=1 // pred_check
      _
    $region19: #{tpu_custom_call.1} parent=1 // pred_check_branch
      %53 = sbr.rel (0) target = $region21
    $region20: #{tpu_custom_call.1} parent=1 // pred_region
      _
    $region21: #{tpu_custom_call.1} parent=1 // pred_fallthru
      _
    // Predicated region
    $region22: #{tpu_custom_call.1} parent=1 // pred_check
      _
    $region23: #{tpu_custom_call.1} parent=1 // pred_check_branch
      %55 = sbr.rel (0) target = $region25
    $region24: #{tpu_custom_call.1} parent=1 // pred_region
      %s57 = ssub.s32 1024, 1024
      %58 = vsyncadd [#allocation11], %s57
      %s59 = sshll.u32 [#allocation12], 4
      %s60 = int_to_ptr.vmem [resolvable:$true] %s59
      %65 = dma.hbm_to_vmem [thread:$0]  %s7, 1024, %s60, [#allocation11], 64, 64, 4
    $region25: #{tpu_custom_call.1} parent=1 // pred_fallthru
      _
    // Predicated region
    $region26: #{tpu_custom_call.1} parent=1 // pred_check
      _
    $region27: #{tpu_custom_call.1} parent=1 // pred_check_branch
      %67 = sbr.rel (0) target = $region29
    $region28: #{tpu_custom_call.1} parent=1 // pred_region
      _
    $region29: #{tpu_custom_call.1} parent=1 // pred_fallthru
      _
    // Predicated region
    $region30: #{tpu_custom_call.1} parent=1 // pred_check
      _
    $region31: #{tpu_custom_call.1} parent=1 // pred_check_branch
      %69 = sbr.rel (0) target = $region33
    $region32: #{tpu_custom_call.1} parent=1 // pred_region
      %70 = dma.done [#allocation8], 3072
    $region33: #{tpu_custom_call.1} parent=1 // pred_fallthru
      _
    // Predicated region
    $region34: #{tpu_custom_call.1} parent=1 // pred_check
      _
    $region35: #{tpu_custom_call.1} parent=1 // pred_check_branch
      %72 = sbr.rel (0) target = $region37
    $region36: #{tpu_custom_call.1} parent=1 // pred_region
      %73 = dma.done [#allocation11], 3072
    $region37: #{tpu_custom_call.1} parent=1 // pred_fallthru
      _
    // Predicated region
    $region38: #{tpu_custom_call.1} parent=1 // pred_check
      _
    $region39: #{tpu_custom_call.1} parent=1 // pred_check_branch
      %75 = sbr.rel (0) target = $region41
    $region40: #{tpu_custom_call.1} parent=1 // pred_region
      %76 = dma.done [#allocation11], 1024
    $region41: #{tpu_custom_call.1} parent=1 // pred_fallthru
      _
    %p78 = scmp.eq.s32.totalorder 0, 0
    // Predicated region
    $region42: #{tpu_custom_call.1} parent=1 // pred_check
      %p79 = pneg %p78
    $region43: #{tpu_custom_call.1} parent=1 // pred_check_branch
      %81 = sbr.rel (%p79) target = $region45
    $region44: #{tpu_custom_call.1} parent=1 // pred_region
      %82 = vst [vmem:[#allocation2 + $0x4] sm:$0xf] 0.0
      %s83 = sld [smem:[#allocation6]]
      %s84 = smul.addr %s83, 16
      %s85 = scalar_lea.hbm %s1, %s84
      // Predicated region
      $region46: #{tpu_custom_call.1} parent=44 // pred_check
        _
      $region47: #{tpu_custom_call.1} parent=44 // pred_check_branch
        %87 = sbr.rel target = $region49
      $region48: #{tpu_custom_call.1} parent=44 // pred_region
        %88 = sst [smem:[#allocation18]] [#allocation17]
        %89 = sst [smem:[#allocation19]] [#allocation16]
      $region49: #{tpu_custom_call.1} parent=44 // pred_fallthru
        _
      %91 = shalt.err (0)
      %s93 = sshll.u32 [#allocation2], 4
      %s94 = int_to_ptr.vmem [resolvable:$true] %s93
      %96 = dma.hbm_to_vmem [thread:$0]  %s85, 16, %s94, [#allocation4]
      %s97 = sld [smem:[#allocation6 + $0x1]]
      %s98 = smul.addr %s97, 16
      %s99 = scalar_lea.hbm %s1, %s98
      %s100 = scalar_lea.vmem [#allocation2], 1
      %s101 = scalar_lea.sflag [#allocation4], 1
      // Predicated region
      $region50: #{tpu_custom_call.1} parent=44 // pred_check
        _
      $region51: #{tpu_custom_call.1} parent=44 // pred_check_branch
        %103 = sbr.rel target = $region53
      $region52: #{tpu_custom_call.1} parent=44 // pred_region
        %104 = sst [smem:[#allocation18]] [#allocation21]
        %105 = sst [smem:[#allocation19]] [#allocation20]
      $region53: #{tpu_custom_call.1} parent=44 // pred_fallthru
        _
      %107 = shalt.err (0)
      %s109 = sshll.u32 %s100, 4
      %s110 = int_to_ptr.vmem [resolvable:$true] %s109
      %112 = dma.hbm_to_vmem [thread:$0]  %s99, 16, %s110, %s101
      %s113 = sld [smem:[#allocation6 + $0x2]]
      %s114 = smul.addr %s113, 16
      %s115 = scalar_lea.hbm %s1, %s114
      %s116 = scalar_lea.vmem [#allocation2], 2
      %s117 = scalar_lea.sflag [#allocation4], 2
      // Predicated region
      $region54: #{tpu_custom_call.1} parent=44 // pred_check
        _
      $region55: #{tpu_custom_call.1} parent=44 // pred_check_branch
        %119 = sbr.rel target = $region57
      $region56: #{tpu_custom_call.1} parent=44 // pred_region
        %120 = sst [smem:[#allocation18]] [#allocation23]
        %121 = sst [smem:[#allocation19]] [#allocation22]
      $region57: #{tpu_custom_call.1} parent=44 // pred_fallthru
        _
      %123 = shalt.err (0)
      %s125 = sshll.u32 %s116, 4
      %s126 = int_to_ptr.vmem [resolvable:$true] %s125
      %128 = dma.hbm_to_vmem [thread:$0]  %s115, 16, %s126, %s117
      %s129 = sld [smem:[#allocation6 + $0x3]]
      %s130 = smul.addr %s129, 16
      %s131 = scalar_lea.hbm %s1, %s130
      %s132 = scalar_lea.vmem [#allocation2], 3
      %s133 = scalar_lea.sflag [#allocation4], 3
      // Predicated region
      $region58: #{tpu_custom_call.1} parent=44 // pred_check
        _
      $region59: #{tpu_custom_call.1} parent=44 // pred_check_branch
        %135 = sbr.rel target = $region61
      $region60: #{tpu_custom_call.1} parent=44 // pred_region
        %136 = sst [smem:[#allocation18]] [#allocation25]
        %137 = sst [smem:[#allocation19]] [#allocation24]
      $region61: #{tpu_custom_call.1} parent=44 // pred_fallthru
        _
      %139 = shalt.err (0)
      %s141 = sshll.u32 %s132, 4
      %s142 = int_to_ptr.vmem [resolvable:$true] %s141
      %144 = dma.hbm_to_vmem [thread:$0]  %s131, 16, %s142, %s133
      %s145 = smul.u32 1, 1
      %s146 = sshll.u32 %s145, 4
      %147 = dma.done [#allocation4], %s146
      %s148 = sshll.u32 %s145, 4
      %149 = dma.done %s101, %s148
      %s150 = sshll.u32 %s145, 4
      %151 = dma.done %s117, %s150
      %s152 = sshll.u32 %s145, 4
      %153 = dma.done %s133, %s152
      %v154 = vld [vmem:[#allocation2] sm:$0xff]
      %v155 = vpack.c.bf16 %v154, %v154
      %v156 = vld [vmem:[%s6] sm:$0xff]
      %v157 = vld [vmem:[#allocation7] sm:$0xff]
      %v158 = vld [vmem:[#allocation7 + $0x8] sm:$0xf]
      %v159 = vld [vmem:[#allocation7 + $0xc] sm:$0xff]
      %v160 = vld [vmem:[#allocation7 + $0x14] sm:$0xf]
      %v161 = vld [vmem:[#allocation7 + $0x18] sm:$0xff]
      %v162 = vld [vmem:[#allocation7 + $0x20] sm:$0xf]
      %v163 = vld [vmem:[#allocation7 + $0x24] sm:$0xff]
      %v164 = vld [vmem:[#allocation7 + $0x2c] sm:$0xf]
      %v165 = vld [vmem:[#allocation7 + $0x30] sm:$0xff]
      %v166 = vld [vmem:[#allocation7 + $0x38] sm:$0xf]
      %v167 = vld [vmem:[#allocation7 + $0x3c] sm:$0xff]
      %v168 = vld [vmem:[#allocation7 + $0x44] sm:$0xf]
      %v169 = vld [vmem:[#allocation7 + $0x48] sm:$0xff]
      %v170 = vld [vmem:[#allocation7 + $0x50] sm:$0xf]
      %v171 = vld [vmem:[#allocation7 + $0x54] sm:$0xff]
      %v172 = vld [vmem:[#allocation7 + $0x5c] sm:$0xf]
      %v173 = vld [vmem:[#allocation7 + $0x60] sm:$0xff]
      %v174 = vld [vmem:[#allocation7 + $0x68] sm:$0xf]
      %v175 = vld [vmem:[#allocation7 + $0x6c] sm:$0xff]
      %v176 = vld [vmem:[#allocation7 + $0x74] sm:$0xf]
      %v177 = vld [vmem:[#allocation7 + $0x78] sm:$0xff]
      %v178 = vld [vmem:[#allocation7 + $0x80] sm:$0xf]
      %v179 = vld [vmem:[#allocation7 + $0x84] sm:$0xff]
      %v180 = vld [vmem:[#allocation7 + $0x8c] sm:$0xf]
      %v181 = vld [vmem:[#allocation7 + $0x90] sm:$0xff]
      %v182 = vld [vmem:[#allocation7 + $0x98] sm:$0xf]
      %v183 = vld [vmem:[#allocation7 + $0x9c] sm:$0xff]
      %v184 = vld [vmem:[#allocation7 + $0xa4] sm:$0xf]
      %v185 = vld [vmem:[#allocation7 + $0xa8] sm:$0xff]
      %v186 = vld [vmem:[#allocation7 + $0xb0] sm:$0xf]
      %v187 = vld [vmem:[#allocation7 + $0xb4] sm:$0xff]
      %v188 = vld [vmem:[#allocation7 + $0xbc] sm:$0xf]
      %v189 = vld [vmem:[%s4] sm:$0x7]
      %v191 = vlaneseq
      %v192 = vshrl.u32 %v191, 7
      %v193 = vsub.s32 0, %v192
      %v194 = vrot.slane %v189, %v193
      %v195 = vlaneseq
      %v196 = vshrl.u32 %v195, 7
      %v197 = vsub.s32 1, %v196
      %v198 = vrot.slane %v189, %v197
      %v199 = vlaneseq
      %v200 = vshrl.u32 %v199, 7
      %v201 = vsub.s32 2, %v200
      %v202 = vrot.slane %v189, %v201
      %v238 = vunpack.c.l.b16 %v157
      %v239 = vunpack.c.h.b16 %v157
      %v240 = vunpack.c.l.b16 %v158
      %v241 = vunpack.c.l.b16 %v159
      %v242 = vunpack.c.h.b16 %v159
      %v243 = vunpack.c.l.b16 %v160
      %v244 = vunpack.c.l.b16 %v161
      %v245 = vunpack.c.h.b16 %v161
      %v246 = vunpack.c.l.b16 %v162
      %v247 = vunpack.c.l.b16 %v163
      %v248 = vunpack.c.h.b16 %v163
      %v249 = vunpack.c.l.b16 %v164
      %v250 = vunpack.c.l.b16 %v165
      %v251 = vunpack.c.h.b16 %v165
      %v252 = vunpack.c.l.b16 %v166
      %v253 = vunpack.c.l.b16 %v167
      %v254 = vunpack.c.h.b16 %v167
      %v255 = vunpack.c.l.b16 %v168
      %v256 = vunpack.c.l.b16 %v169
      %v257 = vunpack.c.h.b16 %v169
      %v258 = vunpack.c.l.b16 %v170
      %v259 = vunpack.c.l.b16 %v171
      %v260 = vunpack.c.h.b16 %v171
      %v261 = vunpack.c.l.b16 %v172
      %v262 = vunpack.c.l.b16 %v173
      %v263 = vunpack.c.h.b16 %v173
      %v264 = vunpack.c.l.b16 %v174
      %v265 = vunpack.c.l.b16 %v175
      %v266 = vunpack.c.h.b16 %v175
      %v267 = vunpack.c.l.b16 %v176
      %v268 = vunpack.c.l.b16 %v177
      %v269 = vunpack.c.h.b16 %v177
      %v270 = vunpack.c.l.b16 %v178
      %v271 = vunpack.c.l.b16 %v179
      %v272 = vunpack.c.h.b16 %v179
      %v273 = vunpack.c.l.b16 %v180
      %v274 = vunpack.c.l.b16 %v181
      %v275 = vunpack.c.h.b16 %v181
      %v276 = vunpack.c.l.b16 %v182
      %v277 = vunpack.c.l.b16 %v183
      %v278 = vunpack.c.h.b16 %v183
      %v279 = vunpack.c.l.b16 %v184
      %v280 = vunpack.c.l.b16 %v185
      %v281 = vunpack.c.h.b16 %v185
      %v282 = vunpack.c.l.b16 %v186
      %v283 = vunpack.c.l.b16 %v187
      %v284 = vunpack.c.h.b16 %v187
      %v285 = vunpack.c.l.b16 %v188
      %v286 = vpack.c.b16 %v241, %v238
      %v287 = vpack.c.b16 %v242, %v239
      %v288 = vpack.c.b16 %v243, %v240
      %v289 = vpack.c.b16 %v247, %v244
      %v290 = vpack.c.b16 %v248, %v245
      %v291 = vpack.c.b16 %v249, %v246
      %v292 = vpack.c.b16 %v253, %v250
      %v293 = vpack.c.b16 %v254, %v251
      %v294 = vpack.c.b16 %v255, %v252
      %v295 = vpack.c.b16 %v259, %v256
      %v296 = vpack.c.b16 %v260, %v257
      %v297 = vpack.c.b16 %v261, %v258
      %v298 = vpack.c.b16 %v265, %v262
      %v299 = vpack.c.b16 %v266, %v263
      %v300 = vpack.c.b16 %v267, %v264
      %v301 = vpack.c.b16 %v271, %v268
      %v302 = vpack.c.b16 %v272, %v269
      %v303 = vpack.c.b16 %v273, %v270
      %v304 = vpack.c.b16 %v277, %v274
      %v305 = vpack.c.b16 %v278, %v275
      %v306 = vpack.c.b16 %v279, %v276
      %v307 = vpack.c.b16 %v283, %v280
      %v308 = vpack.c.b16 %v284, %v281
      %v309 = vpack.c.b16 %v285, %v282
      %334 = vmatprep.subr.bf16.mxu0 %v287
      %335 = vmatpush1.bf16.msra.mxu0 %v286
      %336 = vmatprep.subr.bf16.mxu0 %v290
      %337 = vmatpush1.bf16.msra.mxu0 %v289
      %338 = vmatprep.subr.bf16.mxu0 %v293
      %339 = vmatpush1.bf16.msra.mxu0 %v292
      %340 = vmatprep.subr.bf16.mxu0 %v296
      %341 = vmatpush1.bf16.msra.mxu0 %v295
      %342 = vmatprep.subr.bf16.mxu0 %v299
      %343 = vmatpush1.bf16.msra.mxu0 %v298
      %344 = vmatprep.subr.bf16.mxu0 %v302
      %345 = vmatpush1.bf16.msra.mxu0 %v301
      %346 = vmatprep.subr.bf16.mxu0 %v305
      %347 = vmatpush1.bf16.msra.mxu0 %v304
      %348 = vmatprep.subr.bf16.mxu0 %v308
      %349 = vmatpush1.bf16.msra.mxu0 %v307
      %350 = vmatprep.subr.bf16.mxu0 0
      %351 = vmatpush1.bf16.msra.mxu0 0
      %352 = vmatprep.subr.bf16.mxu0 0
      %353 = vmatpush1.bf16.msra.mxu0 0
      %354 = vmatprep.subr.bf16.mxu0 0
      %355 = vmatpush1.bf16.msra.mxu0 0
      %356 = vmatprep.subr.bf16.mxu0 0
      %357 = vmatpush1.bf16.msra.mxu0 0
      %358 = vmatprep.subr.bf16.mxu0 0
      %359 = vmatpush1.bf16.msra.mxu0 0
      %360 = vmatprep.subr.bf16.mxu0 0
      %361 = vmatpush1.bf16.msra.mxu0 0
      %362 = vmatprep.subr.bf16.mxu0 0
      %363 = vmatpush1.bf16.msra.mxu0 0
      %364 = vmatprep.subr.bf16.mxu0 0
      %365 = vmatpush1.bf16.msra.mxu0 0
      %366 = vmatprep.mubr.bf16.mxu0 0
      %367 = vmatmul.mubr.bf16.gmra.mrb[0].mxu0 %v155
      %v368 = vpop.f32.mrb[0].mxu0
      %v369 = vadd.f32 %v194, %v368
      %v370 = vpop.f32.mrb[0].mxu0
      %v371 = vadd.f32 %v198, %v370
      %v372 = vpop.f32.mrb[0].mxu0
      %v373 = vpop.f32.mrb[0].mxu0
      %374 = vdwg.mxu0
      %375 = vmatprep.subr.bf16.mxu0 0
      %376 = vmatpush1.bf16.msra.mxu0 %v288
      %377 = vmatprep.subr.bf16.mxu0 0
      %378 = vmatpush1.bf16.msra.mxu0 %v291
      %379 = vmatprep.subr.bf16.mxu0 0
      %380 = vmatpush1.bf16.msra.mxu0 %v294
      %381 = vmatprep.subr.bf16.mxu0 0
      %382 = vmatpush1.bf16.msra.mxu0 %v297
      %383 = vmatprep.subr.bf16.mxu0 0
      %384 = vmatpush1.bf16.msra.mxu0 %v300
      %385 = vmatprep.subr.bf16.mxu0 0
      %386 = vmatpush1.bf16.msra.mxu0 %v303
      %387 = vmatprep.subr.bf16.mxu0 0
      %388 = vmatpush1.bf16.msra.mxu0 %v306
      %389 = vmatprep.subr.bf16.mxu0 0
      %390 = vmatpush1.bf16.msra.mxu0 %v309
      %391 = vmatprep.subr.bf16.mxu0 0
      %392 = vmatpush1.bf16.msra.mxu0 0
      %393 = vmatprep.subr.bf16.mxu0 0
      %394 = vmatpush1.bf16.msra.mxu0 0
      %395 = vmatprep.subr.bf16.mxu0 0
      %396 = vmatpush1.bf16.msra.mxu0 0
      %397 = vmatprep.subr.bf16.mxu0 0
      %398 = vmatpush1.bf16.msra.mxu0 0
      %399 = vmatprep.subr.bf16.mxu0 0
      %400 = vmatpush1.bf16.msra.mxu0 0
      %401 = vmatprep.subr.bf16.mxu0 0
      %402 = vmatpush1.bf16.msra.mxu0 0
      %403 = vmatprep.subr.bf16.mxu0 0
      %404 = vmatpush1.bf16.msra.mxu0 0
      %405 = vmatprep.subr.bf16.mxu0 0
      %406 = vmatpush1.bf16.msra.mxu0 0
      %407 = vmatprep.mubr.bf16.mxu0 0
      %408 = vmatmul.mubr.bf16.gmra.mrb[0].mxu0 %v155
      %v409 = vpop.f32.mrb[0].mxu0
      %v410 = vadd.f32 %v202, %v409
      %v411 = vpop.f32.mrb[0].mxu0
      %v412 = vpop.f32.mrb[0].mxu0
      %v413 = vpop.f32.mrb[0].mxu0
      %414 = vdwg.mxu0
      %v415 = vpack.c.bf16 %v156, %v156
      %v416 = vld [vmem:[#allocation10] sm:$0xff]
      %v417 = vld [vmem:[#allocation10 + $0x8] sm:$0xf]
      %v418 = vld [vmem:[#allocation10 + $0xc] sm:$0xff]
      %v419 = vld [vmem:[#allocation10 + $0x14] sm:$0xf]
      %v420 = vld [vmem:[#allocation10 + $0x18] sm:$0xff]
      %v421 = vld [vmem:[#allocation10 + $0x20] sm:$0xf]
      %v422 = vld [vmem:[#allocation10 + $0x24] sm:$0xff]
      %v423 = vld [vmem:[#allocation10 + $0x2c] sm:$0xf]
      %v424 = vld [vmem:[#allocation10 + $0x30] sm:$0xff]
      %v425 = vld [vmem:[#allocation10 + $0x38] sm:$0xf]
      %v426 = vld [vmem:[#allocation10 + $0x3c] sm:$0xff]
      %v427 = vld [vmem:[#allocation10 + $0x44] sm:$0xf]
      %v428 = vld [vmem:[#allocation10 + $0x48] sm:$0xff]
      %v429 = vld [vmem:[#allocation10 + $0x50] sm:$0xf]
      %v430 = vld [vmem:[#allocation10 + $0x54] sm:$0xff]
      %v431 = vld [vmem:[#allocation10 + $0x5c] sm:$0xf]
      %v432 = vld [vmem:[#allocation10 + $0x60] sm:$0xff]
      %v433 = vld [vmem:[#allocation10 + $0x68] sm:$0xf]
      %v434 = vld [vmem:[#allocation10 + $0x6c] sm:$0xff]
      %v435 = vld [vmem:[#allocation10 + $0x74] sm:$0xf]
      %v436 = vld [vmem:[#allocation10 + $0x78] sm:$0xff]
      %v437 = vld [vmem:[#allocation10 + $0x80] sm:$0xf]
      %v438 = vld [vmem:[#allocation10 + $0x84] sm:$0xff]
      %v439 = vld [vmem:[#allocation10 + $0x8c] sm:$0xf]
      %v440 = vld [vmem:[#allocation10 + $0x90] sm:$0xff]
      %v441 = vld [vmem:[#allocation10 + $0x98] sm:$0xf]
      %v442 = vld [vmem:[#allocation10 + $0x9c] sm:$0xff]
      %v443 = vld [vmem:[#allocation10 + $0xa4] sm:$0xf]
      %v444 = vld [vmem:[#allocation10 + $0xa8] sm:$0xff]
      %v445 = vld [vmem:[#allocation10 + $0xb0] sm:$0xf]
      %v446 = vld [vmem:[#allocation10 + $0xb4] sm:$0xff]
      %v447 = vld [vmem:[#allocation10 + $0xbc] sm:$0xf]
      %v448 = vld [vmem:[%s5] sm:$0x7]
      %v450 = vlaneseq
      %v451 = vshrl.u32 %v450, 7
      %v452 = vsub.s32 0, %v451
      %v453 = vrot.slane %v448, %v452
      %v454 = vlaneseq
      %v455 = vshrl.u32 %v454, 7
      %v456 = vsub.s32 1, %v455
      %v457 = vrot.slane %v448, %v456
      %v458 = vlaneseq
      %v459 = vshrl.u32 %v458, 7
      %v460 = vsub.s32 2, %v459
      %v461 = vrot.slane %v448, %v460
      %v497 = vunpack.c.l.b16 %v416
      %v498 = vunpack.c.h.b16 %v416
      %v499 = vunpack.c.l.b16 %v417
      %v500 = vunpack.c.l.b16 %v418
      %v501 = vunpack.c.h.b16 %v418
      %v502 = vunpack.c.l.b16 %v419
      %v503 = vunpack.c.l.b16 %v420
      %v504 = vunpack.c.h.b16 %v420
      %v505 = vunpack.c.l.b16 %v421
      %v506 = vunpack.c.l.b16 %v422
      %v507 = vunpack.c.h.b16 %v422
      %v508 = vunpack.c.l.b16 %v423
      %v509 = vunpack.c.l.b16 %v424
      %v510 = vunpack.c.h.b16 %v424
      %v511 = vunpack.c.l.b16 %v425
      %v512 = vunpack.c.l.b16 %v426
      %v513 = vunpack.c.h.b16 %v426
      %v514 = vunpack.c.l.b16 %v427
      %v515 = vunpack.c.l.b16 %v428
      %v516 = vunpack.c.h.b16 %v428
      %v517 = vunpack.c.l.b16 %v429
      %v518 = vunpack.c.l.b16 %v430
      %v519 = vunpack.c.h.b16 %v430
      %v520 = vunpack.c.l.b16 %v431
      %v521 = vunpack.c.l.b16 %v432
      %v522 = vunpack.c.h.b16 %v432
      %v523 = vunpack.c.l.b16 %v433
      %v524 = vunpack.c.l.b16 %v434
      %v525 = vunpack.c.h.b16 %v434
      %v526 = vunpack.c.l.b16 %v435
      %v527 = vunpack.c.l.b16 %v436
      %v528 = vunpack.c.h.b16 %v436
      %v529 = vunpack.c.l.b16 %v437
      %v530 = vunpack.c.l.b16 %v438
      %v531 = vunpack.c.h.b16 %v438
      %v532 = vunpack.c.l.b16 %v439
      %v533 = vunpack.c.l.b16 %v440
      %v534 = vunpack.c.h.b16 %v440
      %v535 = vunpack.c.l.b16 %v441
      %v536 = vunpack.c.l.b16 %v442
      %v537 = vunpack.c.h.b16 %v442
      %v538 = vunpack.c.l.b16 %v443
      %v539 = vunpack.c.l.b16 %v444
      %v540 = vunpack.c.h.b16 %v444
      %v541 = vunpack.c.l.b16 %v445
      %v542 = vunpack.c.l.b16 %v446
      %v543 = vunpack.c.h.b16 %v446
      %v544 = vunpack.c.l.b16 %v447
      %v545 = vpack.c.b16 %v500, %v497
      %v546 = vpack.c.b16 %v501, %v498
      %v547 = vpack.c.b16 %v502, %v499
      %v548 = vpack.c.b16 %v506, %v503
      %v549 = vpack.c.b16 %v507, %v504
      %v550 = vpack.c.b16 %v508, %v505
      %v551 = vpack.c.b16 %v512, %v509
      %v552 = vpack.c.b16 %v513, %v510
      %v553 = vpack.c.b16 %v514, %v511
      %v554 = vpack.c.b16 %v518, %v515
      %v555 = vpack.c.b16 %v519, %v516
      %v556 = vpack.c.b16 %v520, %v517
      %v557 = vpack.c.b16 %v524, %v521
      %v558 = vpack.c.b16 %v525, %v522
      %v559 = vpack.c.b16 %v526, %v523
      %v560 = vpack.c.b16 %v530, %v527
      %v561 = vpack.c.b16 %v531, %v528
      %v562 = vpack.c.b16 %v532, %v529
      %v563 = vpack.c.b16 %v536, %v533
      %v564 = vpack.c.b16 %v537, %v534
      %v565 = vpack.c.b16 %v538, %v535
      %v566 = vpack.c.b16 %v542, %v539
      %v567 = vpack.c.b16 %v543, %v540
      %v568 = vpack.c.b16 %v544, %v541
      %593 = vmatprep.subr.bf16.mxu0 %v546
      %594 = vmatpush1.bf16.msra.mxu0 %v545
      %595 = vmatprep.subr.bf16.mxu0 %v549
      %596 = vmatpush1.bf16.msra.mxu0 %v548
      %597 = vmatprep.subr.bf16.mxu0 %v552
      %598 = vmatpush1.bf16.msra.mxu0 %v551
      %599 = vmatprep.subr.bf16.mxu0 %v555
      %600 = vmatpush1.bf16.msra.mxu0 %v554
      %601 = vmatprep.subr.bf16.mxu0 %v558
      %602 = vmatpush1.bf16.msra.mxu0 %v557
      %603 = vmatprep.subr.bf16.mxu0 %v561
      %604 = vmatpush1.bf16.msra.mxu0 %v560
      %605 = vmatprep.subr.bf16.mxu0 %v564
      %606 = vmatpush1.bf16.msra.mxu0 %v563
      %607 = vmatprep.subr.bf16.mxu0 %v567
      %608 = vmatpush1.bf16.msra.mxu0 %v566
      %609 = vmatprep.subr.bf16.mxu0 0
      %610 = vmatpush1.bf16.msra.mxu0 0
      %611 = vmatprep.subr.bf16.mxu0 0
      %612 = vmatpush1.bf16.msra.mxu0 0
      %613 = vmatprep.subr.bf16.mxu0 0
      %614 = vmatpush1.bf16.msra.mxu0 0
      %615 = vmatprep.subr.bf16.mxu0 0
      %616 = vmatpush1.bf16.msra.mxu0 0
      %617 = vmatprep.subr.bf16.mxu0 0
      %618 = vmatpush1.bf16.msra.mxu0 0
      %619 = vmatprep.subr.bf16.mxu0 0
      %620 = vmatpush1.bf16.msra.mxu0 0
      %621 = vmatprep.subr.bf16.mxu0 0
      %622 = vmatpush1.bf16.msra.mxu0 0
      %623 = vmatprep.subr.bf16.mxu0 0
      %624 = vmatpush1.bf16.msra.mxu0 0
      %625 = vmatprep.mubr.bf16.mxu0 0
      %626 = vmatmul.mubr.bf16.gmra.mrb[0].mxu0 %v415
      %v627 = vpop.f32.mrb[0].mxu0
      %v628 = vadd.f32 %v453, %v627
      %v629 = vpop.f32.mrb[0].mxu0
      %v630 = vadd.f32 %v457, %v629
      %v631 = vpop.f32.mrb[0].mxu0
      %v632 = vpop.f32.mrb[0].mxu0
      %633 = vdwg.mxu0
      %634 = vmatprep.subr.bf16.mxu0 0
      %635 = vmatpush1.bf16.msra.mxu0 %v547
      %636 = vmatprep.subr.bf16.mxu0 0
      %637 = vmatpush1.bf16.msra.mxu0 %v550
      %638 = vmatprep.subr.bf16.mxu0 0
      %639 = vmatpush1.bf16.msra.mxu0 %v553
      %640 = vmatprep.subr.bf16.mxu0 0
      %641 = vmatpush1.bf16.msra.mxu0 %v556
      %642 = vmatprep.subr.bf16.mxu0 0
      %643 = vmatpush1.bf16.msra.mxu0 %v559
      %644 = vmatprep.subr.bf16.mxu0 0
      %645 = vmatpush1.bf16.msra.mxu0 %v562
      %646 = vmatprep.subr.bf16.mxu0 0
      %647 = vmatpush1.bf16.msra.mxu0 %v565
      %648 = vmatprep.subr.bf16.mxu0 0
      %649 = vmatpush1.bf16.msra.mxu0 %v568
      %650 = vmatprep.subr.bf16.mxu0 0
      %651 = vmatpush1.bf16.msra.mxu0 0
      %652 = vmatprep.subr.bf16.mxu0 0
      %653 = vmatpush1.bf16.msra.mxu0 0
      %654 = vmatprep.subr.bf16.mxu0 0
      %655 = vmatpush1.bf16.msra.mxu0 0
      %656 = vmatprep.subr.bf16.mxu0 0
      %657 = vmatpush1.bf16.msra.mxu0 0
      %658 = vmatprep.subr.bf16.mxu0 0
      %659 = vmatpush1.bf16.msra.mxu0 0
      %660 = vmatprep.subr.bf16.mxu0 0
      %661 = vmatpush1.bf16.msra.mxu0 0
      %662 = vmatprep.subr.bf16.mxu0 0
      %663 = vmatpush1.bf16.msra.mxu0 0
      %664 = vmatprep.subr.bf16.mxu0 0
      %665 = vmatpush1.bf16.msra.mxu0 0
      %666 = vmatprep.mubr.bf16.mxu0 0
      %667 = vmatmul.mubr.bf16.gmra.mrb[0].mxu0 %v415
      %v668 = vpop.f32.mrb[0].mxu0
      %v669 = vadd.f32 %v461, %v668
      %v670 = vpop.f32.mrb[0].mxu0
      %v671 = vpop.f32.mrb[0].mxu0
      %v672 = vpop.f32.mrb[0].mxu0
      %673 = vdwg.mxu0
      %v674 = vadd.f32 %v369, %v628
      %v675 = vxor.u32 %v674, 2147483648
      %v676 = vmul.f32 %v675, 1.442695
      %v677 = vpow.pop %v676
      %v678 = vadd.f32 %v677, 1.0
      %v679 = vrcp.pop %v678
      %v680 = vmul.f32 1.0, %v679
      %v681 = vadd.f32 %v371, %v630
      %v682 = vxor.u32 %v681, 2147483648
      %v683 = vmul.f32 %v682, 1.442695
      %v684 = vpow.pop %v683
      %v685 = vadd.f32 %v684, 1.0
      %v686 = vrcp.pop %v685
      %v687 = vmul.f32 1.0, %v686
      %v688 = vmul.f32 %v680, %v669
      %v689 = vadd.f32 %v410, %v688
      %v690 = vtanh.pop %v689
      %v691 = vsub.f32 1.0, %v687
      %v692 = vmul.f32 %v691, %v690
      %v693 = vmul.f32 %v687, %v156
      %v694 = vadd.f32 %v692, %v693
      %695 = vst [vmem:[#allocation14] sm:$0xff] %v694
      %v696 = vpack.c.bf16 %v694, %v694
      %697 = vst [vmem:[#allocation3] sm:$0xf] %v696
    $region45: #{tpu_custom_call.1} parent=1 // pred_fallthru
      _
    %v698 = vld [vmem:[#allocation3] sm:$0xf]
    %v699 = vld [vmem:[#allocation12] sm:$0xf]
    %v700 = vld [vmem:[#allocation12 + $0x4] sm:$0xf]
    %v701 = vld [vmem:[#allocation12 + $0x8] sm:$0xf]
    %v702 = vld [vmem:[#allocation12 + $0xc] sm:$0xf]
    %v703 = vld [vmem:[#allocation12 + $0x10] sm:$0xf]
    %v704 = vld [vmem:[#allocation12 + $0x14] sm:$0xf]
    %v705 = vld [vmem:[#allocation12 + $0x18] sm:$0xf]
    %v706 = vld [vmem:[#allocation12 + $0x1c] sm:$0xf]
    %v707 = vld [vmem:[#allocation12 + $0x20] sm:$0xf]
    %v708 = vld [vmem:[#allocation12 + $0x24] sm:$0xf]
    %v709 = vld [vmem:[#allocation12 + $0x28] sm:$0xf]
    %v710 = vld [vmem:[#allocation12 + $0x2c] sm:$0xf]
    %v711 = vld [vmem:[#allocation12 + $0x30] sm:$0xf]
    %v712 = vld [vmem:[#allocation12 + $0x34] sm:$0xf]
    %v713 = vld [vmem:[#allocation12 + $0x38] sm:$0xf]
    %v714 = vld [vmem:[#allocation12 + $0x3c] sm:$0xf]
    %v715 = vld [vmem:[%s8] sm:$0x1]
    %v717 = vlaneseq
    %v718 = vshrl.u32 %v717, 7
    %v719 = vsub.s32 0, %v718
    %v720 = vrot.slane %v715, %v719
    %v738 = vunpack.c.l.b16 %v699
    %v739 = vunpack.c.l.b16 %v700
    %v740 = vunpack.c.l.b16 %v701
    %v741 = vunpack.c.l.b16 %v702
    %v742 = vunpack.c.l.b16 %v703
    %v743 = vunpack.c.l.b16 %v704
    %v744 = vunpack.c.l.b16 %v705
    %v745 = vunpack.c.l.b16 %v706
    %v746 = vunpack.c.l.b16 %v707
    %v747 = vunpack.c.l.b16 %v708
    %v748 = vunpack.c.l.b16 %v709
    %v749 = vunpack.c.l.b16 %v710
    %v750 = vunpack.c.l.b16 %v711
    %v751 = vunpack.c.l.b16 %v712
    %v752 = vunpack.c.l.b16 %v713
    %v753 = vunpack.c.l.b16 %v714
    %v754 = vpack.c.b16 %v739, %v738
    %v755 = vpack.c.b16 %v741, %v740
    %v756 = vpack.c.b16 %v743, %v742
    %v757 = vpack.c.b16 %v745, %v744
    %v758 = vpack.c.b16 %v747, %v746
    %v759 = vpack.c.b16 %v749, %v748
    %v760 = vpack.c.b16 %v751, %v750
    %v761 = vpack.c.b16 %v753, %v752
    %770 = vmatprep.subr.bf16.mxu0 0
    %771 = vmatpush1.bf16.msra.mxu0 %v754
    %772 = vmatprep.subr.bf16.mxu0 0
    %773 = vmatpush1.bf16.msra.mxu0 %v755
    %774 = vmatprep.subr.bf16.mxu0 0
    %775 = vmatpush1.bf16.msra.mxu0 %v756
    %776 = vmatprep.subr.bf16.mxu0 0
    %777 = vmatpush1.bf16.msra.mxu0 %v757
    %778 = vmatprep.subr.bf16.mxu0 0
    %779 = vmatpush1.bf16.msra.mxu0 %v758
    %780 = vmatprep.subr.bf16.mxu0 0
    %781 = vmatpush1.bf16.msra.mxu0 %v759
    %782 = vmatprep.subr.bf16.mxu0 0
    %783 = vmatpush1.bf16.msra.mxu0 %v760
    %784 = vmatprep.subr.bf16.mxu0 0
    %785 = vmatpush1.bf16.msra.mxu0 %v761
    %786 = vmatprep.subr.bf16.mxu0 0
    %787 = vmatpush1.bf16.msra.mxu0 0
    %788 = vmatprep.subr.bf16.mxu0 0
    %789 = vmatpush1.bf16.msra.mxu0 0
    %790 = vmatprep.subr.bf16.mxu0 0
    %791 = vmatpush1.bf16.msra.mxu0 0
    %792 = vmatprep.subr.bf16.mxu0 0
    %793 = vmatpush1.bf16.msra.mxu0 0
    %794 = vmatprep.subr.bf16.mxu0 0
    %795 = vmatpush1.bf16.msra.mxu0 0
    %796 = vmatprep.subr.bf16.mxu0 0
    %797 = vmatpush1.bf16.msra.mxu0 0
    %798 = vmatprep.subr.bf16.mxu0 0
    %799 = vmatpush1.bf16.msra.mxu0 0
    %800 = vmatprep.subr.bf16.mxu0 0
    %801 = vmatpush1.bf16.msra.mxu0 0
    %802 = vmatprep.mubr.bf16.mxu0 0
    %803 = vmatmul.mubr.bf16.gmra.mrb[0].mxu0 %v698
    %v804 = vpop.f32.mrb[0].mxu0
    %v805 = vadd.f32 %v720, %v804
    %v806 = vpop.f32.mrb[0].mxu0
    %v807 = vpop.f32.mrb[0].mxu0
    %v808 = vpop.f32.mrb[0].mxu0
    %809 = vdwg.mxu0
    %810 = vst [vmem:[#allocation13] sm:$0xff] %v805
    // Predicated region
    $region62: #{tpu_custom_call.1} parent=1 // pred_check
      _
    $region63: #{tpu_custom_call.1} parent=1 // pred_check_branch
      %812 = sbr.rel (0) target = $region65
    $region64: #{tpu_custom_call.1} parent=1 // pred_region
      %s814 = ssub.s32 128, 128
      %815 = vsyncadd [#allocation9], %s814
      %s817 = sshll.u32 [#allocation13], 4
      %s818 = int_to_ptr.vmem [resolvable:$true] %s817
      %820 = dma.vmem_to_hbm [thread:$0]  %s818, 128, %s9, [#allocation9]
    $region65: #{tpu_custom_call.1} parent=1 // pred_fallthru
      _
    // Predicated region
    $region66: #{tpu_custom_call.1} parent=1 // pred_check
      _
    $region67: #{tpu_custom_call.1} parent=1 // pred_check_branch
      %822 = sbr.rel (0) target = $region69
    $region68: #{tpu_custom_call.1} parent=1 // pred_region
      %s824 = ssub.s32 128, 128
      %825 = vsyncadd [#allocation15], %s824
      %s827 = sshll.u32 [#allocation14], 4
      %s828 = int_to_ptr.vmem [resolvable:$true] %s827
      %830 = dma.vmem_to_hbm [thread:$0]  %s828, 128, %s10, [#allocation15]
    $region69: #{tpu_custom_call.1} parent=1 // pred_fallthru
      _
    // Predicated region
    $region70: #{tpu_custom_call.1} parent=1 // pred_check
      _
    $region71: #{tpu_custom_call.1} parent=1 // pred_check_branch
      %832 = sbr.rel (0) target = $region73
    $region72: #{tpu_custom_call.1} parent=1 // pred_region
      %833 = dma.done [#allocation9], 128
    $region73: #{tpu_custom_call.1} parent=1 // pred_fallthru
      _
    // Predicated region
    $region74: #{tpu_custom_call.1} parent=1 // pred_check
      _
    $region75: #{tpu_custom_call.1} parent=1 // pred_check_branch
      %835 = sbr.rel (0) target = $region77
    $region76: #{tpu_custom_call.1} parent=1 // pred_region
      %836 = dma.done [#allocation15], 128
    $region77: #{tpu_custom_call.1} parent=1 // pred_fallthru
      _
    %837 = vsyncpa [#allocation8], 1
    %838 = vsyncpa [#allocation11], 1
    %839 = vsyncpa [#allocation9], 1
    %840 = vsyncpa [#allocation15], 1
  %841 = vsyncmov [#allocation4]
  %s842 = vpop.sfrf %841
  %p843 = scmp.eq.s32.totalorder %s842, 0
  %p844 = pneg %p843
  %846 = shalt.err (%p844)
  %s847 = scalar_lea.sflag [#allocation4], 1
  %848 = vsyncmov %s847
  %s849 = vpop.sfrf %848
  %p850 = scmp.eq.s32.totalorder %s849, 0
  %p851 = pneg %p850
  %853 = shalt.err (%p851)
  %s854 = scalar_lea.sflag [#allocation4], 2
  %855 = vsyncmov %s854
  %s856 = vpop.sfrf %855
  %p857 = scmp.eq.s32.totalorder %s856, 0
  %p858 = pneg %p857
  %860 = shalt.err (%p858)
  %s861 = scalar_lea.sflag [#allocation4], 3
  %862 = vsyncmov %s861
  %s863 = vpop.sfrf %862
  %p864 = scmp.eq.s32.totalorder %s863, 0
  %p865 = pneg %p864
  %867 = shalt.err (%p865)

</llo_original>
